<compile_context>
chip_gen: v7x
topology: tpu7x:2x2x1
jax: 0.10.0
libtpu: 0.0.40
codegen_flags: <defaults>
</compile_context>

<pallas_src>
import functools

import jax
import jax.numpy as jnp
from jax import lax
from jax.experimental import pallas as pl
from jax.experimental.pallas import tpu as pltpu


def linear_kernel(x_ref, w_ref, b_ref, o_ref):
    # x: (tb, K)   w: (OUT, K) — native nn.Linear layout   b: (1, OUT)
    x = x_ref[...]
    w = w_ref[...]
    b = b_ref[...]
    # Contract last dim of x with last dim of w  ==  x @ w.T  on the MXU,
    # without ever materializing a lane-sparse (K, OUT) tile.
    acc = lax.dot_general(
        x, w,
        dimension_numbers=(((1,), (1,)), ((), ())),
        preferred_element_type=jnp.float32,
    )  # (tb, OUT)
    o_ref[...] = (acc + b).astype(o_ref.dtype)


@functools.partial(jax.jit, static_argnames=("block_b",))
def perceptron_forward(x, weight, bias, *, block_b=256):
    """x: (B, 1000); weight: (2, 1000); bias: (2,) — mirrors nn.Linear(1000, 2)."""
    B, K = x.shape
    OUT = weight.shape[0]
    b2d = bias.reshape(1, OUT)  # fused into this jitted dispatch

    if B <= block_b or B % block_b != 0:
        # Small / non-divisible batch: whole problem fits in VMEM, no grid,
        # no per-step pipeline overhead.
        return pl.pallas_call(
            linear_kernel,
            out_shape=jax.ShapeDtypeStruct((B, OUT), x.dtype),
            in_specs=[
                pl.BlockSpec(memory_space=pltpu.MemorySpace.VMEM),
                pl.BlockSpec(memory_space=pltpu.MemorySpace.VMEM),
                pl.BlockSpec(memory_space=pltpu.MemorySpace.VMEM),
            ],
            out_specs=pl.BlockSpec(memory_space=pltpu.MemorySpace.VMEM),
        )(x, weight, b2d)

    # Large batch: tile the batch axis so x DMA overlaps the matmul and the
    # batch axis can be sharded across TensorCores (v7x megacore).
    # 2 buffers x (256 x 1000 f32) ~= 2 MiB << 64 MiB v7x VMEM.
    grid = (pl.cdiv(B, block_b),)
    return pl.pallas_call(
        linear_kernel,
        out_shape=jax.ShapeDtypeStruct((B, OUT), x.dtype),
        grid_spec=pl.GridSpec(
            grid=grid,
            in_specs=[
                pl.BlockSpec((block_b, K), lambda i: (i, 0)),
                pl.BlockSpec((OUT, K), lambda i: (0, 0)),   # weight stays resident
                pl.BlockSpec((1, OUT), lambda i: (0, 0)),   # bias stays resident
            ],
            out_specs=pl.BlockSpec((block_b, OUT), lambda i: (i, 0)),
        ),
        compiler_params=pltpu.CompilerParams(
            dimension_semantics=("parallel",),
        ),
    )(x, weight, b2d)


if __name__ == "__main__":
    key = jax.random.PRNGKey(0)
    kx, kw, kb = jax.random.split(key, 3)

    B, IN, OUT = 8, 1000, 2
    x = jax.random.normal(kx, (B, IN), dtype=jnp.float32)

    # Parameter init matching nn.Linear(1000, 2) shapes
    # (uniform(-1/sqrt(in), 1/sqrt(in)), like PyTorch's default init).
    bound = 1.0 / jnp.sqrt(jnp.float32(IN))
    weight = jax.random.uniform(kw, (OUT, IN), dtype=jnp.float32,
                                minval=-bound, maxval=bound)
    bias = jax.random.uniform(kb, (OUT,), dtype=jnp.float32,
                              minval=-bound, maxval=bound)

    out = perceptron_forward(x, weight, bias)
    out = jax.block_until_ready(out)

    # Sanity check against pure-JAX reference.
    ref = x @ weight.T + bias
    assert out.shape == (B, OUT)
    assert jnp.allclose(out, ref, atol=1e-4, rtol=1e-4)

    # Also exercise the batch-tiled path at a modest size.
    B2 = 512
    x2 = jax.random.normal(kx, (B2, IN), dtype=jnp.float32)
    out2 = jax.block_until_ready(perceptron_forward(x2, weight, bias))
    ref2 = x2 @ weight.T + bias
    assert out2.shape == (B2, OUT)
    assert jnp.allclose(out2, ref2, atol=1e-4, rtol=1e-4)

    print("KERNEL_OK")
</pallas_src>

<mosaic_0001>
module attributes {stable_mosaic.version = 11 : i64} {
  func.func @linear_kernel(%arg0: memref<8x1000xf32, #tpu.memory_space<vmem>>, %arg1: memref<2x1000xf32, #tpu.memory_space<vmem>>, %arg2: memref<1x2xf32, #tpu.memory_space<vmem>>, %arg3: memref<8x2xf32, #tpu.memory_space<vmem>>) attributes {dimension_semantics = [], scalar_prefetch = 0 : i64, scratch_operands = 0 : i64, tpu.core_type = #tpu.core_type<tc>} {
    %c0 = arith.constant 0 : index
    %c0_0 = arith.constant 0 : index
    %0 = vector.load %arg0[%c0, %c0_0] : memref<8x1000xf32, #tpu.memory_space<vmem>>, vector<8x1000xf32>
    %c0_1 = arith.constant 0 : index
    %c0_2 = arith.constant 0 : index
    %1 = vector.load %arg1[%c0_1, %c0_2] : memref<2x1000xf32, #tpu.memory_space<vmem>>, vector<2x1000xf32>
    %c0_3 = arith.constant 0 : index
    %c0_4 = arith.constant 0 : index
    %2 = vector.load %arg2[%c0_3, %c0_4] : memref<1x2xf32, #tpu.memory_space<vmem>>, vector<1x2xf32>
    %cst = arith.constant dense<0.000000e+00> : vector<8x2xf32>
    %3 = tpu.matmul %0, %1, %cst {dimension_numbers = #tpu.dot_dimension_numbers<[1], [1], [0], [0], [0, 0, 1, 0], [], []>} : vector<8x1000xf32>, vector<2x1000xf32>, vector<8x2xf32> -> vector<8x2xf32>
    %4 = vector.broadcast %2 : vector<1x2xf32> to vector<8x2xf32>
    %5 = arith.addf %3, %4 : vector<8x2xf32>
    %c0_5 = arith.constant 0 : index
    %c0_6 = arith.constant 0 : index
    %6 = vector.load %arg3[%c0_5, %c0_6] : memref<8x2xf32, #tpu.memory_space<vmem>>, vector<8x2xf32>
    tpu.vector_store %arg3[%c0_5, %c0_6], %5 {strides = array<i32>} : memref<8x2xf32, #tpu.memory_space<vmem>>, vector<8x2xf32>,
    return
  }
}

</mosaic_0001>

<llo_original>
// kernel: perceptron_forward.1
$region0: #{perceptron_forward.1}
  #allocation0 [shape = 'u32[]', space=smem, size = 0x4, offset = 0x4, fixed_abs, tag = 'smem constant byte address 0x4 - core index']
  #allocation1 [shape = 'u32[144,128]{1,0:T(1,128)}', space=vmem, size = 0x12000, scoped, tag = 'internal scratch']
  %s0 = inlined_call_operand.hbm [shape: f32[8,1000], index: 0, kind: input, shape index: {}]
  %s1 = inlined_call_operand.hbm [shape: f32[2,1000], index: 1, kind: input, shape index: {}]
  %s2 = inlined_call_operand.vmem [shape: f32[1,2], index: 2, kind: input, shape index: {}]
  %s3 = inlined_call_operand.vmem [shape: f32[8,2], index: 3, kind: output, shape index: {}]
  %s4 = sld [smem:[#allocation0]]
  $region30: #{perceptron_forward.1} parent=0
    _
  %s6 = ssub.s32 1, %s4
  %s7 = scalar_select 0, %s6, %s4
  $region1: #{perceptron_forward.1} parent=0
    #allocation2 [shape = 'u8[32768]{0}', space=vmem, size = 0x8000, scoped, tag = 'input window, operand 0, single buffered']
    #allocation3 [shape = 's32[1]{0}', space=sflag, size = 0x4, scoped, tag = 'scoped memory for perceptron_forward.1']
    #allocation4 [shape = 'u8[8192]{0}', space=vmem, size = 0x2000, scoped, tag = 'input window, operand 1, single buffered']
    #allocation5 [shape = 's32[1]{0}', space=sflag, size = 0x4, scoped, tag = 'scoped memory for perceptron_forward.1']
    %8 = vsyncpa [#allocation3], 0
    %9 = vsyncpa [#allocation5], 0
    // Predicated region
    $region2: #{perceptron_forward.1} parent=1 // pred_check
      _
    $region3: #{perceptron_forward.1} parent=1 // pred_check_branch
      %11 = sbr.rel (0) target = $region5
    $region4: #{perceptron_forward.1} parent=1 // pred_region
      %s13 = ssub.s32 1024, 1024
      %14 = vsyncadd [#allocation3], %s13
      %s16 = sshll.u32 [#allocation2], 4
      %s17 = int_to_ptr.vmem [resolvable:$true] %s16
      %19 = dma.hbm_to_vmem [thread:$0]  %s0, 1024, %s17, [#allocation3]
    $region5: #{perceptron_forward.1} parent=1 // pred_fallthru
      _
    // Predicated region
    $region6: #{perceptron_forward.1} parent=1 // pred_check
      _
    $region7: #{perceptron_forward.1} parent=1 // pred_check_branch
      %21 = sbr.rel (0) target = $region9
    $region8: #{perceptron_forward.1} parent=1 // pred_region
      %s23 = ssub.s32 256, 256
      %24 = vsyncadd [#allocation5], %s23
      %s26 = sshll.u32 [#allocation4], 4
      %s27 = int_to_ptr.vmem [resolvable:$true] %s26
      %29 = dma.hbm_to_vmem [thread:$0]  %s1, 256, %s27, [#allocation5]
    $region9: #{perceptron_forward.1} parent=1 // pred_fallthru
      _
    // Predicated region
    $region10: #{perceptron_forward.1} parent=1 // pred_check
      _
    $region11: #{perceptron_forward.1} parent=1 // pred_check_branch
      %31 = sbr.rel (0) target = $region13
    $region12: #{perceptron_forward.1} parent=1 // pred_region
      _
    $region13: #{perceptron_forward.1} parent=1 // pred_fallthru
      _
    // Predicated region
    $region14: #{perceptron_forward.1} parent=1 // pred_check
      _
    $region15: #{perceptron_forward.1} parent=1 // pred_check_branch
      %33 = sbr.rel (0) target = $region17
    $region16: #{perceptron_forward.1} parent=1 // pred_region
      %34 = dma.done [#allocation3], 1024
    $region17: #{perceptron_forward.1} parent=1 // pred_fallthru
      _
    // Predicated region
    $region18: #{perceptron_forward.1} parent=1 // pred_check
      _
    $region19: #{perceptron_forward.1} parent=1 // pred_check_branch
      %36 = sbr.rel (0) target = $region21
    $region20: #{perceptron_forward.1} parent=1 // pred_region
      %37 = dma.done [#allocation5], 256
    $region21: #{perceptron_forward.1} parent=1 // pred_fallthru
      _
    %v38 = vld [vmem:[#allocation2] sm:$0xff]
    %v39 = vld [vmem:[#allocation2 + $0x8] sm:$0xff]
    %v40 = vld [vmem:[#allocation2 + $0x10] sm:$0xff]
    %v41 = vld [vmem:[#allocation2 + $0x18] sm:$0xff]
    %v42 = vld [vmem:[#allocation2 + $0x20] sm:$0xff]
    %v43 = vld [vmem:[#allocation2 + $0x28] sm:$0xff]
    %v44 = vld [vmem:[#allocation2 + $0x30] sm:$0xff]
    %v45 = vld [vmem:[#allocation2 + $0x38] sm:$0xff]
    %v46 = vld [vmem:[#allocation4] sm:$0xff]
    %v47 = vld [vmem:[#allocation4 + $0x8] sm:$0xff]
    %v48 = vld [vmem:[%s2] sm:$0x1]
    %v50 = vlaneseq
    %v51 = vshrl.u32 %v50, 7
    %v52 = vsub.s32 0, %v51
    %v53 = vrot.slane %v48, %v52
    %v57 = vcombine.high %v46, %v46
    %v59 = vunpack.c.l.s4 1983009808
    %v60 = vunpack.c.0.s8 %v59
    %v61 = vlaneseq
    %v62 = vshrl.u32 %v61, 7
    %v63 = vsub.s32 %v60, %v62
    %v64 = vrot.slane %v46, %v63
    %v66 = vunpack.c.l.s4 1983009808
    %v67 = vunpack.c.0.s8 %v66
    %v68 = vlaneseq
    %v69 = vshrl.u32 %v68, 7
    %v70 = vsub.s32 %v67, %v69
    %v71 = vrot.slane %v57, %v70
    %v72 = vcombine.high %v64, %v64
    %v73 = vcombine.high %v71, %v71
    %v74 = vcombine.high %v47, %v47
    %v76 = vunpack.c.l.s4 1983009808
    %v77 = vunpack.c.0.s8 %v76
    %v78 = vlaneseq
    %v79 = vshrl.u32 %v78, 7
    %v80 = vsub.s32 %v77, %v79
    %v81 = vrot.slane %v47, %v80
    %v83 = vunpack.c.l.s4 1983009808
    %v84 = vunpack.c.0.s8 %v83
    %v85 = vlaneseq
    %v86 = vshrl.u32 %v85, 7
    %v87 = vsub.s32 %v84, %v86
    %v88 = vrot.slane %v74, %v87
    %v89 = vcombine.high %v81, %v81
    %v90 = vcombine.high %v88, %v88
    %vm98 = vcmask 850944
    %v100 = vsel %vm98, %v45, 0
    %v102 = vsel %vm98, %v90, 0
    %104 = vmatprep.subr.mxu0 %v72
    %105 = vmatpush1.xpose.msra.mxu0 %v64
    %106 = vmatprep.subr.mxu0 0.0
    %107 = vmatpush1.xpose.msra.mxu0 0.0
    %108 = vmatprep.subr.mxu0 0.0
    %109 = vmatpush1.xpose.msra.mxu0 0.0
    %110 = vmatprep.subr.mxu0 0.0
    %111 = vmatpush1.xpose.msra.mxu0 0.0
    %112 = vmatprep.subr.mxu0 0.0
    %113 = vmatpush1.xpose.msra.mxu0 0.0
    %114 = vmatprep.subr.mxu0 0.0
    %115 = vmatpush1.xpose.msra.mxu0 0.0
    %116 = vmatprep.subr.mxu0 0.0
    %117 = vmatpush1.xpose.msra.mxu0 0.0
    %118 = vmatprep.subr.mxu0 0.0
    %119 = vmatpush1.xpose.msra.mxu0 0.0
    %120 = vmatprep.subr.mxu0 0.0
    %121 = vmatpush1.xpose.msra.mxu0 0.0
    %122 = vmatprep.subr.mxu0 0.0
    %123 = vmatpush1.xpose.msra.mxu0 0.0
    %124 = vmatprep.subr.mxu0 0.0
    %125 = vmatpush1.xpose.msra.mxu0 0.0
    %126 = vmatprep.subr.mxu0 0.0
    %127 = vmatpush1.xpose.msra.mxu0 0.0
    %128 = vmatprep.subr.mxu0 0.0
    %129 = vmatpush1.xpose.msra.mxu0 0.0
    %130 = vmatprep.subr.mxu0 0.0
    %131 = vmatpush1.xpose.msra.mxu0 0.0
    %132 = vmatprep.subr.mxu0 0.0
    %133 = vmatpush1.xpose.msra.mxu0 0.0
    %134 = vmatprep.subr.mxu0 0.0
    %135 = vmatpush1.xpose.msra.mxu0 0.0
    %136 = vmatprep.subr.mxu0 0.0
    %137 = vmatpush1.xpose.msra.mxu0 0.0
    %138 = vmatprep.subr.mxu0 0.0
    %139 = vmatpush1.xpose.msra.mxu0 0.0
    %140 = vmatprep.subr.mxu0 0.0
    %141 = vmatpush1.xpose.msra.mxu0 0.0
    %142 = vmatprep.subr.mxu0 0.0
    %143 = vmatpush1.xpose.msra.mxu0 0.0
    %144 = vmatprep.subr.mxu0 0.0
    %145 = vmatpush1.xpose.msra.mxu0 0.0
    %146 = vmatprep.subr.mxu0 0.0
    %147 = vmatpush1.xpose.msra.mxu0 0.0
    %148 = vmatprep.subr.mxu0 0.0
    %149 = vmatpush1.xpose.msra.mxu0 0.0
    %150 = vmatprep.subr.mxu0 0.0
    %151 = vmatpush1.xpose.msra.mxu0 0.0
    %152 = vmatprep.subr.mxu0 0.0
    %153 = vmatpush1.xpose.msra.mxu0 0.0
    %154 = vmatprep.subr.mxu0 0.0
    %155 = vmatpush1.xpose.msra.mxu0 0.0
    %156 = vmatprep.subr.mxu0 0.0
    %157 = vmatpush1.xpose.msra.mxu0 0.0
    %158 = vmatprep.subr.mxu0 0.0
    %159 = vmatpush1.xpose.msra.mxu0 0.0
    %160 = vmatprep.subr.mxu0 0.0
    %161 = vmatpush1.xpose.msra.mxu0 0.0
    %162 = vmatprep.subr.mxu0 0.0
    %163 = vmatpush1.xpose.msra.mxu0 0.0
    %164 = vmatprep.subr.mxu0 0.0
    %165 = vmatpush1.xpose.msra.mxu0 0.0
    %166 = vmatprep.subr.mxu0 0.0
    %167 = vmatpush1.xpose.msra.mxu0 0.0
    %168 = vmatprep.mubr.f32.mxu0 %v39
    %169 = vmatmul.mubr.f32.gmra.mrb[0].mxu0 %v38
    %v170 = vpop.f32.mrb[0].mxu0
    %v171 = vadd.f32 %v53, %v170
    %v172 = vpop.f32.mrb[0].mxu0
    %173 = vdwg.mxu0
    %174 = vmatprep.subr.mxu0 %v73
    %175 = vmatpush1.xpose.msra.mxu0 %v71
    %176 = vmatprep.subr.mxu0 0.0
    %177 = vmatpush1.xpose.msra.mxu0 0.0
    %178 = vmatprep.subr.mxu0 0.0
    %179 = vmatpush1.xpose.msra.mxu0 0.0
    %180 = vmatprep.subr.mxu0 0.0
    %181 = vmatpush1.xpose.msra.mxu0 0.0
    %182 = vmatprep.subr.mxu0 0.0
    %183 = vmatpush1.xpose.msra.mxu0 0.0
    %184 = vmatprep.subr.mxu0 0.0
    %185 = vmatpush1.xpose.msra.mxu0 0.0
    %186 = vmatprep.subr.mxu0 0.0
    %187 = vmatpush1.xpose.msra.mxu0 0.0
    %188 = vmatprep.subr.mxu0 0.0
    %189 = vmatpush1.xpose.msra.mxu0 0.0
    %190 = vmatprep.subr.mxu0 0.0
    %191 = vmatpush1.xpose.msra.mxu0 0.0
    %192 = vmatprep.subr.mxu0 0.0
    %193 = vmatpush1.xpose.msra.mxu0 0.0
    %194 = vmatprep.subr.mxu0 0.0
    %195 = vmatpush1.xpose.msra.mxu0 0.0
    %196 = vmatprep.subr.mxu0 0.0
    %197 = vmatpush1.xpose.msra.mxu0 0.0
    %198 = vmatprep.subr.mxu0 0.0
    %199 = vmatpush1.xpose.msra.mxu0 0.0
    %200 = vmatprep.subr.mxu0 0.0
    %201 = vmatpush1.xpose.msra.mxu0 0.0
    %202 = vmatprep.subr.mxu0 0.0
    %203 = vmatpush1.xpose.msra.mxu0 0.0
    %204 = vmatprep.subr.mxu0 0.0
    %205 = vmatpush1.xpose.msra.mxu0 0.0
    %206 = vmatprep.subr.mxu0 0.0
    %207 = vmatpush1.xpose.msra.mxu0 0.0
    %208 = vmatprep.subr.mxu0 0.0
    %209 = vmatpush1.xpose.msra.mxu0 0.0
    %210 = vmatprep.subr.mxu0 0.0
    %211 = vmatpush1.xpose.msra.mxu0 0.0
    %212 = vmatprep.subr.mxu0 0.0
    %213 = vmatpush1.xpose.msra.mxu0 0.0
    %214 = vmatprep.subr.mxu0 0.0
    %215 = vmatpush1.xpose.msra.mxu0 0.0
    %216 = vmatprep.subr.mxu0 0.0
    %217 = vmatpush1.xpose.msra.mxu0 0.0
    %218 = vmatprep.subr.mxu0 0.0
    %219 = vmatpush1.xpose.msra.mxu0 0.0
    %220 = vmatprep.subr.mxu0 0.0
    %221 = vmatpush1.xpose.msra.mxu0 0.0
    %222 = vmatprep.subr.mxu0 0.0
    %223 = vmatpush1.xpose.msra.mxu0 0.0
    %224 = vmatprep.subr.mxu0 0.0
    %225 = vmatpush1.xpose.msra.mxu0 0.0
    %226 = vmatprep.subr.mxu0 0.0
    %227 = vmatpush1.xpose.msra.mxu0 0.0
    %228 = vmatprep.subr.mxu0 0.0
    %229 = vmatpush1.xpose.msra.mxu0 0.0
    %230 = vmatprep.subr.mxu0 0.0
    %231 = vmatpush1.xpose.msra.mxu0 0.0
    %232 = vmatprep.subr.mxu0 0.0
    %233 = vmatpush1.xpose.msra.mxu0 0.0
    %234 = vmatprep.subr.mxu0 0.0
    %235 = vmatpush1.xpose.msra.mxu0 0.0
    %236 = vmatprep.subr.mxu0 0.0
    %237 = vmatpush1.xpose.msra.mxu0 0.0
    %238 = vmatprep.mubr.f32.mxu0 %v41
    %239 = vmatmul.mubr.f32.gmra.mrb[0].mxu0 %v40
    %v240 = vpop.f32.mrb[0].mxu0
    %v241 = vadd.f32 %v171, %v240
    %v242 = vpop.f32.mrb[0].mxu0
    %243 = vdwg.mxu0
    %244 = vmatprep.subr.mxu0 %v89
    %245 = vmatpush1.xpose.msra.mxu0 %v81
    %246 = vmatprep.subr.mxu0 0.0
    %247 = vmatpush1.xpose.msra.mxu0 0.0
    %248 = vmatprep.subr.mxu0 0.0
    %249 = vmatpush1.xpose.msra.mxu0 0.0
    %250 = vmatprep.subr.mxu0 0.0
    %251 = vmatpush1.xpose.msra.mxu0 0.0
    %252 = vmatprep.subr.mxu0 0.0
    %253 = vmatpush1.xpose.msra.mxu0 0.0
    %254 = vmatprep.subr.mxu0 0.0
    %255 = vmatpush1.xpose.msra.mxu0 0.0
    %256 = vmatprep.subr.mxu0 0.0
    %257 = vmatpush1.xpose.msra.mxu0 0.0
    %258 = vmatprep.subr.mxu0 0.0
    %259 = vmatpush1.xpose.msra.mxu0 0.0
    %260 = vmatprep.subr.mxu0 0.0
    %261 = vmatpush1.xpose.msra.mxu0 0.0
    %262 = vmatprep.subr.mxu0 0.0
    %263 = vmatpush1.xpose.msra.mxu0 0.0
    %264 = vmatprep.subr.mxu0 0.0
    %265 = vmatpush1.xpose.msra.mxu0 0.0
    %266 = vmatprep.subr.mxu0 0.0
    %267 = vmatpush1.xpose.msra.mxu0 0.0
    %268 = vmatprep.subr.mxu0 0.0
    %269 = vmatpush1.xpose.msra.mxu0 0.0
    %270 = vmatprep.subr.mxu0 0.0
    %271 = vmatpush1.xpose.msra.mxu0 0.0
    %272 = vmatprep.subr.mxu0 0.0
    %273 = vmatpush1.xpose.msra.mxu0 0.0
    %274 = vmatprep.subr.mxu0 0.0
    %275 = vmatpush1.xpose.msra.mxu0 0.0
    %276 = vmatprep.subr.mxu0 0.0
    %277 = vmatpush1.xpose.msra.mxu0 0.0
    %278 = vmatprep.subr.mxu0 0.0
    %279 = vmatpush1.xpose.msra.mxu0 0.0
    %280 = vmatprep.subr.mxu0 0.0
    %281 = vmatpush1.xpose.msra.mxu0 0.0
    %282 = vmatprep.subr.mxu0 0.0
    %283 = vmatpush1.xpose.msra.mxu0 0.0
    %284 = vmatprep.subr.mxu0 0.0
    %285 = vmatpush1.xpose.msra.mxu0 0.0
    %286 = vmatprep.subr.mxu0 0.0
    %287 = vmatpush1.xpose.msra.mxu0 0.0
    %288 = vmatprep.subr.mxu0 0.0
    %289 = vmatpush1.xpose.msra.mxu0 0.0
    %290 = vmatprep.subr.mxu0 0.0
    %291 = vmatpush1.xpose.msra.mxu0 0.0
    %292 = vmatprep.subr.mxu0 0.0
    %293 = vmatpush1.xpose.msra.mxu0 0.0
    %294 = vmatprep.subr.mxu0 0.0
    %295 = vmatpush1.xpose.msra.mxu0 0.0
    %296 = vmatprep.subr.mxu0 0.0
    %297 = vmatpush1.xpose.msra.mxu0 0.0
    %298 = vmatprep.subr.mxu0 0.0
    %299 = vmatpush1.xpose.msra.mxu0 0.0
    %300 = vmatprep.subr.mxu0 0.0
    %301 = vmatpush1.xpose.msra.mxu0 0.0
    %302 = vmatprep.subr.mxu0 0.0
    %303 = vmatpush1.xpose.msra.mxu0 0.0
    %304 = vmatprep.subr.mxu0 0.0
    %305 = vmatpush1.xpose.msra.mxu0 0.0
    %306 = vmatprep.subr.mxu0 0.0
    %307 = vmatpush1.xpose.msra.mxu0 0.0
    %308 = vmatprep.mubr.f32.mxu0 %v43
    %309 = vmatmul.mubr.f32.gmra.mrb[0].mxu0 %v42
    %v310 = vpop.f32.mrb[0].mxu0
    %v311 = vadd.f32 %v241, %v310
    %v312 = vpop.f32.mrb[0].mxu0
    %313 = vdwg.mxu0
    %314 = vmatprep.subr.mxu0 %v102
    %315 = vmatpush1.xpose.msra.mxu0 %v88
    %316 = vmatprep.subr.mxu0 0.0
    %317 = vmatpush1.xpose.msra.mxu0 0.0
    %318 = vmatprep.subr.mxu0 0.0
    %319 = vmatpush1.xpose.msra.mxu0 0.0
    %320 = vmatprep.subr.mxu0 0.0
    %321 = vmatpush1.xpose.msra.mxu0 0.0
    %322 = vmatprep.subr.mxu0 0.0
    %323 = vmatpush1.xpose.msra.mxu0 0.0
    %324 = vmatprep.subr.mxu0 0.0
    %325 = vmatpush1.xpose.msra.mxu0 0.0
    %326 = vmatprep.subr.mxu0 0.0
    %327 = vmatpush1.xpose.msra.mxu0 0.0
    %328 = vmatprep.subr.mxu0 0.0
    %329 = vmatpush1.xpose.msra.mxu0 0.0
    %330 = vmatprep.subr.mxu0 0.0
    %331 = vmatpush1.xpose.msra.mxu0 0.0
    %332 = vmatprep.subr.mxu0 0.0
    %333 = vmatpush1.xpose.msra.mxu0 0.0
    %334 = vmatprep.subr.mxu0 0.0
    %335 = vmatpush1.xpose.msra.mxu0 0.0
    %336 = vmatprep.subr.mxu0 0.0
    %337 = vmatpush1.xpose.msra.mxu0 0.0
    %338 = vmatprep.subr.mxu0 0.0
    %339 = vmatpush1.xpose.msra.mxu0 0.0
    %340 = vmatprep.subr.mxu0 0.0
    %341 = vmatpush1.xpose.msra.mxu0 0.0
    %342 = vmatprep.subr.mxu0 0.0
    %343 = vmatpush1.xpose.msra.mxu0 0.0
    %344 = vmatprep.subr.mxu0 0.0
    %345 = vmatpush1.xpose.msra.mxu0 0.0
    %346 = vmatprep.subr.mxu0 0.0
    %347 = vmatpush1.xpose.msra.mxu0 0.0
    %348 = vmatprep.subr.mxu0 0.0
    %349 = vmatpush1.xpose.msra.mxu0 0.0
    %350 = vmatprep.subr.mxu0 0.0
    %351 = vmatpush1.xpose.msra.mxu0 0.0
    %352 = vmatprep.subr.mxu0 0.0
    %353 = vmatpush1.xpose.msra.mxu0 0.0
    %354 = vmatprep.subr.mxu0 0.0
    %355 = vmatpush1.xpose.msra.mxu0 0.0
    %356 = vmatprep.subr.mxu0 0.0
    %357 = vmatpush1.xpose.msra.mxu0 0.0
    %358 = vmatprep.subr.mxu0 0.0
    %359 = vmatpush1.xpose.msra.mxu0 0.0
    %360 = vmatprep.subr.mxu0 0.0
    %361 = vmatpush1.xpose.msra.mxu0 0.0
    %362 = vmatprep.subr.mxu0 0.0
    %363 = vmatpush1.xpose.msra.mxu0 0.0
    %364 = vmatprep.subr.mxu0 0.0
    %365 = vmatpush1.xpose.msra.mxu0 0.0
    %366 = vmatprep.subr.mxu0 0.0
    %367 = vmatpush1.xpose.msra.mxu0 0.0
    %368 = vmatprep.subr.mxu0 0.0
    %369 = vmatpush1.xpose.msra.mxu0 0.0
    %370 = vmatprep.subr.mxu0 0.0
    %371 = vmatpush1.xpose.msra.mxu0 0.0
    %372 = vmatprep.subr.mxu0 0.0
    %373 = vmatpush1.xpose.msra.mxu0 0.0
    %374 = vmatprep.subr.mxu0 0.0
    %375 = vmatpush1.xpose.msra.mxu0 0.0
    %376 = vmatprep.subr.mxu0 0.0
    %377 = vmatpush1.xpose.msra.mxu0 0.0
    %378 = vmatprep.mubr.f32.mxu0 %v100
    %379 = vmatmul.mubr.f32.gmra.mrb[0].mxu0 %v44
    %v380 = vpop.f32.mrb[0].mxu0
    %v381 = vadd.f32 %v311, %v380
    %v382 = vpop.f32.mrb[0].mxu0
    %383 = vdwg.mxu0
    %vm384 = vcmask 15360
    %385 = vst.msk [vmem:[%s3] sm:$0xff] %vm384, %v381
    // Predicated region
    $region22: #{perceptron_forward.1} parent=1 // pred_check
      _
    $region23: #{perceptron_forward.1} parent=1 // pred_check_branch
      %387 = sbr.rel (0) target = $region25
    $region24: #{perceptron_forward.1} parent=1 // pred_region
      _
    $region25: #{perceptron_forward.1} parent=1 // pred_fallthru
      _
    // Predicated region
    $region26: #{perceptron_forward.1} parent=1 // pred_check
      _
    $region27: #{perceptron_forward.1} parent=1 // pred_check_branch
      %389 = sbr.rel (0) target = $region29
    $region28: #{perceptron_forward.1} parent=1 // pred_region
      _
    $region29: #{perceptron_forward.1} parent=1 // pred_fallthru
      _
    %390 = vsyncpa [#allocation3], 1
    %391 = vsyncpa [#allocation5], 1

</llo_original>
